<compile_context>
chip_gen: v7x
topology: tpu7x:2x2x1
jax: 0.10.0
libtpu: 0.0.40
codegen_flags: <defaults>
</compile_context>

<pallas_src>
import jax
import jax.numpy as jnp
from jax.experimental import pallas as pl
from jax.experimental.pallas import tpu as pltpu

LANES = 128
SUBLANES = 8


def _iu_loss_kernel(x_ref, t_ref, out_ref):
    """Accumulate sum of softplus(-x) where target == 1 into a (1,8,128) block."""
    i = pl.program_id(1)  # row-block (reduction) axis

    @pl.when(i == 0)
    def _():
        out_ref[...] = jnp.zeros_like(out_ref)

    x = x_ref[...].astype(jnp.float32)
    nx = -x
    # BCEWithLogits(x, 1) = softplus(-x) = max(-x, 0) + log1p(exp(-|x|)),
    # with -|x| == min(x, -x) to reuse the single negation.
    pos = jnp.maximum(nx, 0.0) + jnp.log1p(jnp.exp(jnp.minimum(x, nx)))
    # Compare targets in their native dtype (no convert, no f32 temporary).
    contrib = jnp.where(t_ref[...] == 1, pos, 0.0)

    # Fold the row axis by 8 with pure VPU adds (tile-aligned reshape); the one
    # cross-lane reduce is deferred to the wrapper.
    part = contrib.reshape(-1, SUBLANES, LANES).sum(axis=0)
    out_ref[...] += part[None]


def _softplus_neg_sum(x, t):
    """XLA fallback for the (< one block) ragged remainder; fuses with the slice."""
    xf = x.astype(jnp.float32)
    pos = jnp.maximum(-xf, 0.0) + jnp.log1p(jnp.exp(-jnp.abs(xf)))
    return jnp.sum(jnp.where(t == 1, pos, 0.0), dtype=jnp.float32)


def _num_tensorcores() -> int:
    """Best-effort TensorCores-per-chip: 2 on v7x, else 1."""
    try:
        kind = jax.devices()[0].device_kind.lower()
    except Exception:
        return 1
    return 2 if ("v7" in kind or "7x" in kind) else 1


def iu_loss(inp, target, *, reduction="mean", block_rows=None):
    """Pallas implementation of IULoss.forward (reduction in {'mean','sum'})."""
    assert inp.shape == target.shape
    assert reduction in ("sum", "mean")
    numel = inp.size
    assert numel > 0

    num_tc = _num_tensorcores()
    if block_rows is None:
        # Larger tiles on v7x: its faster HBM makes the fixed per-step overhead
        # relatively bigger, so amortize it harder. Both are multiples of 32.
        block_rows = 8192 if num_tc >= 2 else 4096
    assert block_rows >= 32 and block_rows % 32 == 0

    x = inp.reshape(-1)   # free (bitcast) reshape; keeps native dtype (f32/bf16/...)
    t = target.reshape(-1)  # native dtype (float / int8 / int32 ...)

    # Sub-32-bit dtypes pack along sublanes: block row count must be a multiple
    # of 32/itemsize (8 for f32, 16 for bf16, 32 for int8).
    min_item = min(x.dtype.itemsize, t.dtype.itemsize)
    row_quant = max(SUBLANES, 32 // max(1, min_item))

    # Pad only so that (a) numel is a multiple of 128 and (b) at least one full
    # row_quant-row block exists. Common shapes need no padding; padded targets
    # are 0 so they contribute nothing.
    rows = max(pl.cdiv(numel, LANES), row_quant)
    padded = rows * LANES
    if padded != numel:
        x = jnp.pad(x, (0, padded - numel))
        t = jnp.pad(t, (0, padded - numel))

    x2 = x.reshape(rows, LANES)
    t2 = t.reshape(rows, LANES)

    # Row-block size: biggest multiple of row_quant fitting both request & array.
    bre = min(block_rows, (rows // row_quant) * row_quant)
    n_full = rows // bre  # full blocks handled by the Pallas kernel (>= 1)

    # 2-way core split only when the chip really has 2 TensorCores, and only
    # exactly (no clamped duplicate blocks -> no wasted DMA on a mem-bound kernel).
    n_split = 2 if (num_tc >= 2 and n_full >= 2) else 1
    n_full_k = (n_full // n_split) * n_split  # blocks covered by the kernel
    bpc = n_full_k // n_split                 # blocks per split
    grid = (n_split, bpc)

    def in_map(c, i):
        return (c * bpc + i, 0)

    if n_split == 2:
        dims = (getattr(pltpu, "CORE_PARALLEL", "parallel"),
                getattr(pltpu, "ARBITRARY", "arbitrary"))
    else:
        dims = ("arbitrary", "arbitrary")

    # VMEM budget: double-buffered inputs + a few block-sized f32 temporaries.
    blk_in_bytes = bre * LANES * (x2.dtype.itemsize + t2.dtype.itemsize)
    blk_f32_bytes = bre * LANES * 4
    vmem_need = 2 * blk_in_bytes + 3 * blk_f32_bytes + 2 * SUBLANES * LANES * 4 + (1 << 16)
    vmem_limit = int(min(max(vmem_need, 32 << 20), 56 << 20))

    kelems = n_full_k * bre * LANES
    cost = pl.CostEstimate(
        flops=7 * kelems,
        transcendentals=2 * kelems,
        bytes_accessed=int(kelems * (x2.dtype.itemsize + t2.dtype.itemsize)
                           + n_split * SUBLANES * LANES * 4),
    )

    partials = pl.pallas_call(
        _iu_loss_kernel,
        out_shape=jax.ShapeDtypeStruct((n_split, SUBLANES, LANES), jnp.float32),
        grid_spec=pltpu.PrefetchScalarGridSpec(
            num_scalar_prefetch=0,
            grid=grid,
            in_specs=[
                pl.BlockSpec((bre, LANES), in_map),
                pl.BlockSpec((bre, LANES), in_map),
            ],
            out_specs=pl.BlockSpec((1, SUBLANES, LANES), lambda c, i: (c, 0, 0)),
        ),
        compiler_params=pltpu.CompilerParams(
            dimension_semantics=dims,
            vmem_limit_bytes=vmem_limit,
        ),
        cost_estimate=cost,
    )(x2, t2)

    loss_sum = jnp.sum(partials)  # one tiny cross-lane reduce in XLA

    # Ragged remainder (< one block of rows): fused XLA expression on a slice.
    rem_row0 = n_full_k * bre
    if rem_row0 < rows:
        loss_sum = loss_sum + _softplus_neg_sum(x2[rem_row0:], t2[rem_row0:])

    if reduction == "sum":
        return loss_sum
    return loss_sum / jnp.float32(numel)


def _iu_loss_ref(inp, target, *, reduction="mean"):
    """Pure-JAX reference for validation."""
    x = inp.reshape(-1).astype(jnp.float32)
    t = target.reshape(-1).astype(jnp.float32)
    pos = jnp.maximum(-x, 0.0) + jnp.log1p(jnp.exp(-jnp.abs(x)))
    s = jnp.sum(jnp.where(t == 1.0, pos, 0.0))
    if reduction == "sum":
        return s
    return s / jnp.float32(inp.size)


if __name__ == "__main__":
    key = jax.random.PRNGKey(0)
    k_in, k_tgt, k_in2, k_tgt2 = jax.random.split(key, 4)

    # Small NCHW-shaped multi-label logit map, consistent with the module.
    B, C, H, W = 2, 4, 16, 16
    logits = jax.random.normal(k_in, (B, C, H, W), dtype=jnp.float32) * 3.0
    # targets in {0, 1, 2}: 1 = observed positive, everything else ignored.
    # Float targets match PyTorch's BCEWithLogits convention; int8/int32 also work.
    targets = jax.random.randint(k_tgt, (B, C, H, W), 0, 3).astype(jnp.float32)

    for reduction in ("mean", "sum"):
        loss = jax.block_until_ready(iu_loss(logits, targets, reduction=reduction))
        ref = _iu_loss_ref(logits, targets, reduction=reduction)
        assert jnp.allclose(loss, ref, rtol=1e-5, atol=1e-5), (reduction, loss, ref)

    # Ragged shape: exercises the small-pad + XLA-tail path.
    shape2 = (2, 3, 7, 11)
    logits2 = jax.random.normal(k_in2, shape2, dtype=jnp.float32)
    targets2 = jax.random.randint(k_tgt2, shape2, 0, 3).astype(jnp.float32)
    loss2 = jax.block_until_ready(iu_loss(logits2, targets2, reduction="mean"))
    ref2 = _iu_loss_ref(logits2, targets2, reduction="mean")
    assert jnp.allclose(loss2, ref2, rtol=1e-5, atol=1e-6), (loss2, ref2)

    print("KERNEL_OK")
</pallas_src>

<mosaic_0001>
module attributes {stable_mosaic.version = 11 : i64} {
  func.func @_iu_loss_kernel(%arg0: i32, %arg1: i32, %arg2: memref<16x128xf32, #tpu.memory_space<vmem>>, %arg3: memref<16x128xf32, #tpu.memory_space<vmem>>, %arg4: memref<1x8x128xf32, #tpu.memory_space<vmem>>) attributes {dimension_semantics = [#tpu.dimension_semantics<arbitrary>, #tpu.dimension_semantics<arbitrary>], iteration_bounds = array<i64: 1, 1>, scalar_prefetch = 0 : i64, scratch_operands = 0 : i64, tpu.core_type = #tpu.core_type<tc>, window_params = [{transform_indices = @transform_0, window_bounds = array<i64: 16, 128>}, {transform_indices = @transform_1, window_bounds = array<i64: 16, 128>}, {transform_indices = @transform_2, window_bounds = array<i64: 1, 8, 128>}]} {
    %c0_i32 = arith.constant 0 : i32
    %0 = arith.cmpi eq, %arg1, %c0_i32 : i32
    %1 = arith.extui %0 : i1 to i32
    %c0_i32_0 = arith.constant 0 : i32
    %2 = arith.cmpi ne, %1, %c0_i32_0 : i32
    scf.if %2 {
      %cst_14 = arith.constant 0.000000e+00 : f32
      %23 = vector.broadcast %cst_14 : f32 to vector<1x8x128xf32>
      %c0_15 = arith.constant 0 : index
      %c0_16 = arith.constant 0 : index
      %c0_17 = arith.constant 0 : index
      %24 = vector.load %arg4[%c0_15, %c0_16, %c0_17] : memref<1x8x128xf32, #tpu.memory_space<vmem>>, vector<1x8x128xf32>
      tpu.vector_store %arg4[%c0_15, %c0_16, %c0_17], %23 {strides = array<i32>} : memref<1x8x128xf32, #tpu.memory_space<vmem>>, vector<1x8x128xf32>,
    } else {
    }
    %c0 = arith.constant 0 : index
    %c0_1 = arith.constant 0 : index
    %3 = vector.load %arg2[%c0, %c0_1] : memref<16x128xf32, #tpu.memory_space<vmem>>, vector<16x128xf32>
    %cst = arith.constant 0.000000e+00 : f32
    %4 = vector.broadcast %cst : f32 to vector<16x128xf32>
    %5 = arith.subf %4, %3 : vector<16x128xf32>
    %cst_2 = arith.constant 0.000000e+00 : f32
    %6 = vector.broadcast %cst_2 : f32 to vector<16x128xf32>
    %7 = arith.maximumf %5, %6 : vector<16x128xf32>
    %8 = arith.minimumf %3, %5 : vector<16x128xf32>
    %9 = math.exp %8 : vector<16x128xf32>
    %10 = math.log1p %9 : vector<16x128xf32>
    %11 = arith.addf %7, %10 : vector<16x128xf32>
    %c0_3 = arith.constant 0 : index
    %c0_4 = arith.constant 0 : index
    %12 = vector.load %arg3[%c0_3, %c0_4] : memref<16x128xf32, #tpu.memory_space<vmem>>, vector<16x128xf32>
    %cst_5 = arith.constant 1.000000e+00 : f32
    %13 = vector.broadcast %cst_5 : f32 to vector<16x128xf32>
    %14 = arith.cmpf oeq, %12, %13 : vector<16x128xf32>
    %cst_6 = arith.constant 0.000000e+00 : f32
    %15 = vector.broadcast %cst_6 : f32 to vector<16x128xf32>
    %16 = arith.select %14, %11, %15 : vector<16x128xi1>, vector<16x128xf32>
    %17 = vector.shape_cast %16 : vector<16x128xf32> to vector<2x8x128xf32>
    %cst_7 = arith.constant dense<0.000000e+00> : vector<8x128xf32>
    %18 = vector.multi_reduction <add>, %17, %cst_7 [0] : vector<2x8x128xf32> to vector<8x128xf32>
    %c0_8 = arith.constant 0 : index
    %c0_9 = arith.constant 0 : index
    %c0_10 = arith.constant 0 : index
    %19 = vector.load %arg4[%c0_8, %c0_9, %c0_10] : memref<1x8x128xf32, #tpu.memory_space<vmem>>, vector<1x8x128xf32>
    %20 = vector.shape_cast %18 : vector<8x128xf32> to vector<1x8x128xf32>
    %21 = arith.addf %19, %20 : vector<1x8x128xf32>
    %c0_11 = arith.constant 0 : index
    %c0_12 = arith.constant 0 : index
    %c0_13 = arith.constant 0 : index
    %22 = vector.load %arg4[%c0_11, %c0_12, %c0_13] : memref<1x8x128xf32, #tpu.memory_space<vmem>>, vector<1x8x128xf32>
    tpu.vector_store %arg4[%c0_11, %c0_12, %c0_13], %21 {strides = array<i32>} : memref<1x8x128xf32, #tpu.memory_space<vmem>>, vector<1x8x128xf32>,
    return
  }
  func.func @transform_0(%arg0: i32, %arg1: i32) -> (i32, i32) {
    %c1_i32 = arith.constant 1 : i32
    %0 = arith.muli %arg0, %c1_i32 : i32
    %1 = arith.addi %0, %arg1 : i32
    %c0_i32 = arith.constant 0 : i32
    %c0_i32_0 = arith.constant 0 : i32
    return %1, %c0_i32 : i32, i32
  }
  func.func @transform_1(%arg0: i32, %arg1: i32) -> (i32, i32) {
    %c1_i32 = arith.constant 1 : i32
    %0 = arith.muli %arg0, %c1_i32 : i32
    %1 = arith.addi %0, %arg1 : i32
    %c0_i32 = arith.constant 0 : i32
    %c0_i32_0 = arith.constant 0 : i32
    return %1, %c0_i32 : i32, i32
  }
  func.func @transform_2(%arg0: i32, %arg1: i32) -> (i32, i32, i32) {
    %c0_i32 = arith.constant 0 : i32
    %c0_i32_0 = arith.constant 0 : i32
    %c0_i32_1 = arith.constant 0 : i32
    return %arg0, %c0_i32, %c0_i32_0 : i32, i32, i32
  }
}

</mosaic_0001>

<llo_original>
// kernel: tpu_custom_call.1
$region0: #{tpu_custom_call.1}
  #allocation0 [shape = 'u32[]', space=smem, size = 0x4, offset = 0x4, fixed_abs, tag = 'smem constant byte address 0x4 - core index']
  #allocation1 [shape = 'u32[144,128]{1,0:T(1,128)}', space=vmem, size = 0x12000, scoped, tag = 'internal scratch']
  %s0 = inlined_call_operand.hbm [shape: f32[16,128], index: 0, kind: input, shape index: {}]
  %s1 = inlined_call_operand.hbm [shape: f32[16,128], index: 1, kind: input, shape index: {}]
  %s2 = inlined_call_operand.hbm [shape: f32[1,8,128], index: 2, kind: output, shape index: {}]
  %s3 = sld [smem:[#allocation0]]
  $region30: #{tpu_custom_call.1} parent=0
    _
  %s5 = ssub.s32 1, %s3
  %s6 = scalar_select 0, %s5, %s3
  $region1: #{tpu_custom_call.1} parent=0
    #allocation2 [shape = 'u8[8192]{0}', space=vmem, size = 0x2000, scoped, tag = 'input window, operand 0, single buffered']
    #allocation3 [shape = 's32[1]{0}', space=sflag, size = 0x4, scoped, tag = 'scoped memory for tpu_custom_call.1']
    #allocation4 [shape = 's32[1]{0}', space=sflag, size = 0x4, scoped, tag = 'scoped memory for tpu_custom_call.1']
    #allocation5 [shape = 'u8[8192]{0}', space=vmem, size = 0x2000, scoped, tag = 'input window, operand 1, single buffered']
    #allocation6 [shape = 's32[1]{0}', space=sflag, size = 0x4, scoped, tag = 'scoped memory for tpu_custom_call.1']
    #allocation7 [shape = 'u8[4096]{0}', space=vmem, size = 0x1000, scoped, tag = 'output window, operand 0, single buffered']
    %7 = vsyncpa [#allocation3], 0
    %8 = vsyncpa [#allocation6], 0
    %9 = vsyncpa [#allocation4], 0
    // Predicated region
    $region2: #{tpu_custom_call.1} parent=1 // pred_check
      _
    $region3: #{tpu_custom_call.1} parent=1 // pred_check_branch
      %11 = sbr.rel (0) target = $region5
    $region4: #{tpu_custom_call.1} parent=1 // pred_region
      %s12 = sadd.s32 0, 0
      %s13 = smul.u32 2, %s12
      %s15 = ssub.s32 256, 256
      %16 = vsyncadd [#allocation3], %s15
      %s17 = smul.addr %s13, 128
      %s18 = scalar_lea.hbm %s0, %s17
      %s19 = sshll.u32 [#allocation2], 4
      %s20 = int_to_ptr.vmem [resolvable:$true] %s19
      %25 = dma.hbm_to_vmem [thread:$0]  %s18, 256, %s20, [#allocation3], 128, 128, 8
    $region5: #{tpu_custom_call.1} parent=1 // pred_fallthru
      _
    // Predicated region
    $region6: #{tpu_custom_call.1} parent=1 // pred_check
      _
    $region7: #{tpu_custom_call.1} parent=1 // pred_check_branch
      %27 = sbr.rel (0) target = $region9
    $region8: #{tpu_custom_call.1} parent=1 // pred_region
      %s28 = sadd.s32 0, 0
      %s29 = smul.u32 2, %s28
      %s31 = ssub.s32 256, 256
      %32 = vsyncadd [#allocation6], %s31
      %s33 = smul.addr %s29, 128
      %s34 = scalar_lea.hbm %s1, %s33
      %s35 = sshll.u32 [#allocation5], 4
      %s36 = int_to_ptr.vmem [resolvable:$true] %s35
      %41 = dma.hbm_to_vmem [thread:$0]  %s34, 256, %s36, [#allocation6], 128, 128, 8
    $region9: #{tpu_custom_call.1} parent=1 // pred_fallthru
      _
    // Predicated region
    $region10: #{tpu_custom_call.1} parent=1 // pred_check
      _
    $region11: #{tpu_custom_call.1} parent=1 // pred_check_branch
      %43 = sbr.rel (0) target = $region13
    $region12: #{tpu_custom_call.1} parent=1 // pred_region
      %44 = dma.done [#allocation3], 256
    $region13: #{tpu_custom_call.1} parent=1 // pred_fallthru
      _
    // Predicated region
    $region14: #{tpu_custom_call.1} parent=1 // pred_check
      _
    $region15: #{tpu_custom_call.1} parent=1 // pred_check_branch
      %46 = sbr.rel (0) target = $region17
    $region16: #{tpu_custom_call.1} parent=1 // pred_region
      %47 = dma.done [#allocation6], 256
    $region17: #{tpu_custom_call.1} parent=1 // pred_fallthru
      _
    %s48 = sadd.s32 0, 0
    %s49 = smul.u32 2, %s48
    %s50 = sadd.s32 0, 0
    %s51 = smul.u32 2, %s50
    %p52 = scmp.eq.s32.totalorder 0, 0
    // Predicated region
    $region18: #{tpu_custom_call.1} parent=1 // pred_check
      %p53 = pneg %p52
    $region19: #{tpu_custom_call.1} parent=1 // pred_check_branch
      %55 = sbr.rel (%p53) target = $region21
    $region20: #{tpu_custom_call.1} parent=1 // pred_region
      %56 = vst [vmem:[#allocation7] sm:$0xff] 0.0
    $region21: #{tpu_custom_call.1} parent=1 // pred_fallthru
      _
    %v57 = vld [vmem:[#allocation2] sm:$0xff]
    %v58 = vld [vmem:[#allocation2 + $0x8] sm:$0xff]
    %v59 = vsub.f32 0.0, %v57
    %v60 = vsub.f32 0.0, %v58
    %v61 = vmax.f32 %v59, 0.0
    %v62 = vmax.f32 %v60, 0.0
    %v63 = vmin.f32 %v57, %v59
    %v64 = vmin.f32 %v58, %v60
    %v65 = vmul.f32 %v63, 1.442695
    %v66 = vpow.pop %v65
    %v67 = vmul.f32 %v64, 1.442695
    %v68 = vpow.pop %v67
    %v69 = vadd.f32 %v66, 1.0
    %v70 = vlog2.pop %v69
    %v71 = vmul.f32 %v70, 0.6931472
    %v72 = vmul.f32 -0.5, %v66
    %v73 = vadd.f32 %v72, 1.0
    %v74 = vmul.f32 %v73, %v66
    %v75 = vand.u32 2147483647, %v66
    %vm76 = vcmp.lt.f32.partialorder %v75, 0.0004427343
    %v77 = vsel %vm76, %v74, %v71
    %v78 = vadd.f32 %v68, 1.0
    %v79 = vlog2.pop %v78
    %v80 = vmul.f32 %v79, 0.6931472
    %v81 = vmul.f32 -0.5, %v68
    %v82 = vadd.f32 %v81, 1.0
    %v83 = vmul.f32 %v82, %v68
    %v84 = vand.u32 2147483647, %v68
    %vm85 = vcmp.lt.f32.partialorder %v84, 0.0004427343
    %v86 = vsel %vm85, %v83, %v80
    %v87 = vadd.f32 %v61, %v77
    %v88 = vadd.f32 %v62, %v86
    %v89 = vld [vmem:[#allocation5] sm:$0xff]
    %v90 = vld [vmem:[#allocation5 + $0x8] sm:$0xff]
    %vm91 = vcmp.eq.f32.partialorder %v89, 1.0
    %vm92 = vcmp.eq.f32.partialorder %v90, 1.0
    %v93 = vsel %vm91, %v87, 0.0
    %v94 = vsel %vm92, %v88, 0.0
    %v95 = vadd.f32 %v93, %v94
    %v96 = vld [vmem:[#allocation7] sm:$0xff]
    %v97 = vadd.f32 %v96, %v95
    %98 = vst [vmem:[#allocation7] sm:$0xff] %v97
    // Predicated region
    $region22: #{tpu_custom_call.1} parent=1 // pred_check
      _
    $region23: #{tpu_custom_call.1} parent=1 // pred_check_branch
      %100 = sbr.rel (0) target = $region25
    $region24: #{tpu_custom_call.1} parent=1 // pred_region
      %s102 = ssub.s32 128, 128
      %103 = vsyncadd [#allocation4], %s102
      %s105 = sshll.u32 [#allocation7], 4
      %s106 = int_to_ptr.vmem [resolvable:$true] %s105
      %108 = dma.vmem_to_hbm [thread:$0]  %s106, 128, %s2, [#allocation4]
    $region25: #{tpu_custom_call.1} parent=1 // pred_fallthru
      _
    // Predicated region
    $region26: #{tpu_custom_call.1} parent=1 // pred_check
      _
    $region27: #{tpu_custom_call.1} parent=1 // pred_check_branch
      %110 = sbr.rel (0) target = $region29
    $region28: #{tpu_custom_call.1} parent=1 // pred_region
      %111 = dma.done [#allocation4], 128
    $region29: #{tpu_custom_call.1} parent=1 // pred_fallthru
      _
    %112 = vsyncpa [#allocation3], 1
    %113 = vsyncpa [#allocation6], 1
    %114 = vsyncpa [#allocation4], 1

</llo_original>
